<compile_context>
chip_gen: v7x
topology: tpu7x:2x2x1
jax: 0.10.0
libtpu: 0.0.40
codegen_flags: <defaults>
</compile_context>

<pallas_src>
import jax
import jax.numpy as jnp
from jax import lax
from jax.experimental import pallas as pl
from jax.experimental.pallas import tpu as pltpu


def _attention_kernel(x_ref, w1t_ref, w2t_ref, w3_ref, b3_ref,
                      ctx_ref, out_ref):
    B, L, D = x_ref.shape
    NL = w2t_ref.shape[1]

    x = x_ref[...]                                   # [B, L, D] f32
    x2d = x.reshape(B * L, D)                        # fold batch into M (exact)
    x2d_bf = x2d.astype(jnp.bfloat16)

    w1t_bf = w1t_ref[...].astype(jnp.bfloat16)       # [D, D]
    w2t_bf = w2t_ref[...].astype(jnp.bfloat16)       # [D, NL]

    # h = tanh(first_linear(x)); row-wise -> batch folded into the M dim.
    h = jnp.tanh(jnp.dot(x2d_bf, w1t_bf,
                         preferred_element_type=jnp.float32))       # [B*L, D]
    # s = second_linear(h)
    s = jnp.dot(h.astype(jnp.bfloat16), w2t_bf,
                preferred_element_type=jnp.float32)                 # [B*L, NL]

    # Per-batch softmax over the sequence axis + context matmul.
    # B is tiny and static -> unrolled Python loop (no grid-step overhead).
    ctx_rows = []
    for b in range(B):
        s_b = s[b * L:(b + 1) * L, :]                               # [L, NL]
        m = jnp.max(s_b, axis=0, keepdims=True)
        e = jnp.exp(s_b - m)
        a_b = e * pl.reciprocal(jnp.sum(e, axis=0, keepdims=True),
                                approx=True)                        # [L, NL]
        # ctx_b = a_b^T @ x_b, contracted over L directly (no transpose tile).
        ctx_b = lax.dot_general(
            a_b.astype(jnp.bfloat16),
            x2d_bf[b * L:(b + 1) * L, :],
            dimension_numbers=(((0,), (0,)), ((), ())),
            preferred_element_type=jnp.float32)                     # [NL, D]
        ctx_rows.append(ctx_b)

    ctx = jnp.stack(ctx_rows, axis=0)                               # [B, NL, D]
    ctx_ref[...] = ctx.astype(ctx_ref.dtype)

    # weighted_output = sum(W3 * ctx, axis=-1) + b3
    wout = jnp.sum(w3_ref[...][None, :, :] * ctx, axis=-1) + b3_ref[...]
    out_ref[...] = wout.astype(out_ref.dtype)                       # [B, NL]


def attention_layer_forward(x, w1, w2, w3, b3):
    """x: [B, L, D]; w1: [D, D]; w2: [NL, D]; w3: [NL, D]; b3: [NL]."""
    B, L, D = x.shape
    NL = w2.shape[0]

    w1t = w1.T                       # [D, D]   (in -> out)
    w2t = w2.T                       # [D, NL]
    b3_2d = b3.reshape(1, NL)

    vmem = pl.BlockSpec(memory_space=pltpu.MemorySpace.VMEM)

    ctx, wout = pl.pallas_call(
        _attention_kernel,
        out_shape=(
            jax.ShapeDtypeStruct((B, NL, D), jnp.float32),
            jax.ShapeDtypeStruct((B, NL), jnp.float32),
        ),
        in_specs=[vmem, vmem, vmem, vmem, vmem],
        out_specs=(
            pl.BlockSpec(memory_space=pltpu.MemorySpace.VMEM),
            pl.BlockSpec(memory_space=pltpu.MemorySpace.VMEM),
        ),
    )(x, w1t, w2t, w3, b3_2d)

    return ctx, wout


def _reference(x, w1, w2, w3, b3):
    h = jnp.tanh(x @ w1.T)
    s = h @ w2.T
    a = jax.nn.softmax(s, axis=1)                    # softmax over seq dim
    att = jnp.swapaxes(a, 1, 2)                      # [B, NL, L]
    ctx = att @ x                                    # [B, NL, D]
    wout = jnp.sum(w3[None] * ctx, axis=2) + b3[None]
    return ctx, wout


if __name__ == "__main__":
    # Module config (single level, no previous-level projection).
    B, L, D = 2, 8, 32          # batch, max_len, size
    n_labels = (16,)            # labels at level 0
    NL = n_labels[0]

    key = jax.random.PRNGKey(0)
    kx, k1, k2, k3 = jax.random.split(key, 4)

    x = jax.random.normal(kx, (B, L, D), dtype=jnp.float32)

    # Deterministic "normal(mean=0, std=0.03)" init, matching _init_weights.
    w1 = 0.03 * jax.random.normal(k1, (D, D), dtype=jnp.float32)   # first_linears[0].weight
    w2 = 0.03 * jax.random.normal(k2, (NL, D), dtype=jnp.float32)  # second_linears[0].weight
    w3 = 0.03 * jax.random.normal(k3, (NL, D), dtype=jnp.float32)  # third_linears[0].weight
    b3 = jnp.zeros((NL,), dtype=jnp.float32)                       # third_linears[0].bias
    # TODO(synk): previous_level_projection concat path (label_level > 0) and
    # padding masks are not exercised here (module forward ignores masks too).

    ctx, wout = attention_layer_forward(x, w1, w2, w3, b3)
    jax.block_until_ready((ctx, wout))

    ctx_ref, wout_ref = _reference(x, w1, w2, w3, b3)
    # bf16 MXU inputs + approx reciprocal -> relaxed tolerance vs f32 reference.
    assert jnp.allclose(ctx, ctx_ref, atol=2e-2, rtol=2e-2)
    assert jnp.allclose(wout, wout_ref, atol=2e-2, rtol=2e-2)

    print("KERNEL_OK")
</pallas_src>

<mosaic_0001>
module attributes {stable_mosaic.version = 11 : i64} {
  func.func @_attention_kernel(%arg0: memref<2x8x32xf32, #tpu.memory_space<vmem>>, %arg1: memref<32x32xf32, #tpu.memory_space<vmem>>, %arg2: memref<32x16xf32, #tpu.memory_space<vmem>>, %arg3: memref<16x32xf32, #tpu.memory_space<vmem>>, %arg4: memref<1x16xf32, #tpu.memory_space<vmem>>, %arg5: memref<2x16x32xf32, #tpu.memory_space<vmem>>, %arg6: memref<2x16xf32, #tpu.memory_space<vmem>>) attributes {dimension_semantics = [], scalar_prefetch = 0 : i64, scratch_operands = 0 : i64, tpu.core_type = #tpu.core_type<tc>} {
    %c0 = arith.constant 0 : index
    %c0_0 = arith.constant 0 : index
    %c0_1 = arith.constant 0 : index
    %0 = vector.load %arg0[%c0, %c0_0, %c0_1] : memref<2x8x32xf32, #tpu.memory_space<vmem>>, vector<2x8x32xf32>
    %1 = vector.shape_cast %0 : vector<2x8x32xf32> to vector<16x32xf32>
    %2 = arith.truncf %1 : vector<16x32xf32> to vector<16x32xbf16>
    %c0_2 = arith.constant 0 : index
    %c0_3 = arith.constant 0 : index
    %3 = vector.load %arg1[%c0_2, %c0_3] : memref<32x32xf32, #tpu.memory_space<vmem>>, vector<32x32xf32>
    %4 = arith.truncf %3 : vector<32x32xf32> to vector<32x32xbf16>
    %c0_4 = arith.constant 0 : index
    %c0_5 = arith.constant 0 : index
    %5 = vector.load %arg2[%c0_4, %c0_5] : memref<32x16xf32, #tpu.memory_space<vmem>>, vector<32x16xf32>
    %6 = arith.truncf %5 : vector<32x16xf32> to vector<32x16xbf16>
    %cst = arith.constant dense<0.000000e+00> : vector<16x32xf32>
    %7 = tpu.matmul %2, %4, %cst {dimension_numbers = #tpu.dot_dimension_numbers<[1], [0], [0], [1], [0, 0, 1, 1], [], []>} : vector<16x32xbf16>, vector<32x32xbf16>, vector<16x32xf32> -> vector<16x32xf32>
    %8 = math.tanh %7 : vector<16x32xf32>
    %9 = arith.truncf %8 : vector<16x32xf32> to vector<16x32xbf16>
    %cst_6 = arith.constant dense<0.000000e+00> : vector<16x16xf32>
    %10 = tpu.matmul %9, %6, %cst_6 {dimension_numbers = #tpu.dot_dimension_numbers<[1], [0], [0], [1], [0, 0, 1, 1], [], []>} : vector<16x32xbf16>, vector<32x16xbf16>, vector<16x16xf32> -> vector<16x16xf32>
    %11 = vector.extract_strided_slice %10 {offsets = [0, 0], sizes = [8, 16], strides = [1, 1]} : vector<16x16xf32> to vector<8x16xf32>
    %cst_7 = arith.constant dense<0xFF800000> : vector<16xf32>
    %12 = vector.multi_reduction <maximumf>, %11, %cst_7 [0] : vector<8x16xf32> to vector<16xf32>
    %13 = vector.shape_cast %12 : vector<16xf32> to vector<1x16xf32>
    %14 = vector.broadcast %13 : vector<1x16xf32> to vector<8x16xf32>
    %15 = arith.subf %11, %14 : vector<8x16xf32>
    %16 = math.exp %15 : vector<8x16xf32>
    %cst_8 = arith.constant dense<0.000000e+00> : vector<16xf32>
    %17 = vector.multi_reduction <add>, %16, %cst_8 [0] : vector<8x16xf32> to vector<16xf32>
    %18 = vector.shape_cast %17 : vector<16xf32> to vector<1x16xf32>
    %19 = tpu.reciprocal %18 {approx = true} : vector<1x16xf32> -> vector<1x16xf32>
    %20 = vector.broadcast %19 : vector<1x16xf32> to vector<8x16xf32>
    %21 = arith.mulf %16, %20 : vector<8x16xf32>
    %22 = arith.truncf %21 : vector<8x16xf32> to vector<8x16xbf16>
    %23 = vector.extract_strided_slice %2 {offsets = [0, 0], sizes = [8, 32], strides = [1, 1]} : vector<16x32xbf16> to vector<8x32xbf16>
    %cst_9 = arith.constant dense<0.000000e+00> : vector<16x32xf32>
    %24 = tpu.matmul %22, %23, %cst_9 {dimension_numbers = #tpu.dot_dimension_numbers<[0], [0], [1], [1], [0, 1, 1, 1], [], []>} : vector<8x16xbf16>, vector<8x32xbf16>, vector<16x32xf32> -> vector<16x32xf32>
    %25 = vector.extract_strided_slice %10 {offsets = [8, 0], sizes = [8, 16], strides = [1, 1]} : vector<16x16xf32> to vector<8x16xf32>
    %cst_10 = arith.constant dense<0xFF800000> : vector<16xf32>
    %26 = vector.multi_reduction <maximumf>, %25, %cst_10 [0] : vector<8x16xf32> to vector<16xf32>
    %27 = vector.shape_cast %26 : vector<16xf32> to vector<1x16xf32>
    %28 = vector.broadcast %27 : vector<1x16xf32> to vector<8x16xf32>
    %29 = arith.subf %25, %28 : vector<8x16xf32>
    %30 = math.exp %29 : vector<8x16xf32>
    %cst_11 = arith.constant dense<0.000000e+00> : vector<16xf32>
    %31 = vector.multi_reduction <add>, %30, %cst_11 [0] : vector<8x16xf32> to vector<16xf32>
    %32 = vector.shape_cast %31 : vector<16xf32> to vector<1x16xf32>
    %33 = tpu.reciprocal %32 {approx = true} : vector<1x16xf32> -> vector<1x16xf32>
    %34 = vector.broadcast %33 : vector<1x16xf32> to vector<8x16xf32>
    %35 = arith.mulf %30, %34 : vector<8x16xf32>
    %36 = arith.truncf %35 : vector<8x16xf32> to vector<8x16xbf16>
    %37 = vector.extract_strided_slice %2 {offsets = [8, 0], sizes = [8, 32], strides = [1, 1]} : vector<16x32xbf16> to vector<8x32xbf16>
    %cst_12 = arith.constant dense<0.000000e+00> : vector<16x32xf32>
    %38 = tpu.matmul %36, %37, %cst_12 {dimension_numbers = #tpu.dot_dimension_numbers<[0], [0], [1], [1], [0, 1, 1, 1], [], []>} : vector<8x16xbf16>, vector<8x32xbf16>, vector<16x32xf32> -> vector<16x32xf32>
    %39 = vector.shape_cast %24 : vector<16x32xf32> to vector<1x16x32xf32>
    %40 = vector.shape_cast %38 : vector<16x32xf32> to vector<1x16x32xf32>
    %41 = tpu.concatenate %39, %40 in 0 : vector<1x16x32xf32>, vector<1x16x32xf32> -> vector<2x16x32xf32>
    %c0_13 = arith.constant 0 : index
    %c0_14 = arith.constant 0 : index
    %c0_15 = arith.constant 0 : index
    %42 = vector.load %arg5[%c0_13, %c0_14, %c0_15] : memref<2x16x32xf32, #tpu.memory_space<vmem>>, vector<2x16x32xf32>
    tpu.vector_store %arg5[%c0_13, %c0_14, %c0_15], %41 {strides = array<i32>} : memref<2x16x32xf32, #tpu.memory_space<vmem>>, vector<2x16x32xf32>,
    %c0_16 = arith.constant 0 : index
    %c0_17 = arith.constant 0 : index
    %43 = vector.load %arg3[%c0_16, %c0_17] : memref<16x32xf32, #tpu.memory_space<vmem>>, vector<16x32xf32>
    %44 = vector.shape_cast %43 : vector<16x32xf32> to vector<1x16x32xf32>
    %45 = vector.broadcast %44 : vector<1x16x32xf32> to vector<2x16x32xf32>
    %46 = arith.mulf %45, %41 : vector<2x16x32xf32>
    %cst_18 = arith.constant dense<0.000000e+00> : vector<2x16xf32>
    %47 = vector.multi_reduction <add>, %46, %cst_18 [2] : vector<2x16x32xf32> to vector<2x16xf32>
    %c0_19 = arith.constant 0 : index
    %c0_20 = arith.constant 0 : index
    %48 = vector.load %arg4[%c0_19, %c0_20] : memref<1x16xf32, #tpu.memory_space<vmem>>, vector<1x16xf32>
    %49 = vector.broadcast %48 : vector<1x16xf32> to vector<2x16xf32>
    %50 = arith.addf %47, %49 : vector<2x16xf32>
    %c0_21 = arith.constant 0 : index
    %c0_22 = arith.constant 0 : index
    %51 = vector.load %arg6[%c0_21, %c0_22] : memref<2x16xf32, #tpu.memory_space<vmem>>, vector<2x16xf32>
    tpu.vector_store %arg6[%c0_21, %c0_22], %50 {strides = array<i32>} : memref<2x16xf32, #tpu.memory_space<vmem>>, vector<2x16xf32>,
    return
  }
}

</mosaic_0001>

<llo_original>
// kernel: tpu_custom_call.1
$region0: #{tpu_custom_call.1}
  #allocation0 [shape = 'u32[]', space=smem, size = 0x4, offset = 0x4, fixed_abs, tag = 'smem constant byte address 0x4 - core index']
  #allocation1 [shape = 'u32[144,128]{1,0:T(1,128)}', space=vmem, size = 0x12000, scoped, tag = 'internal scratch']
  %s0 = inlined_call_operand.vmem [shape: f32[2,8,32], index: 0, kind: input, shape index: {}]
  %s1 = inlined_call_operand.vmem [shape: f32[32,32], index: 1, kind: input, shape index: {}]
  %s2 = inlined_call_operand.vmem [shape: f32[32,16], index: 2, kind: input, shape index: {}]
  %s3 = inlined_call_operand.hbm [shape: f32[16,32], index: 3, kind: input, shape index: {}]
  %s4 = inlined_call_operand.vmem [shape: f32[1,16], index: 4, kind: input, shape index: {}]
  %s5 = inlined_call_operand.hbm [shape: f32[2,16,32], index: 5, kind: output, shape index: {0}]
  %s6 = inlined_call_operand.hbm [shape: f32[2,16], index: 6, kind: output, shape index: {1}]
  %7 = xla_tuple %s5, %s6
  %s8 = sld [smem:[#allocation0]]
  $region42: #{tpu_custom_call.1} parent=0
    _
  %s10 = ssub.s32 1, %s8
  %s11 = scalar_select 0, %s10, %s8
  $region1: #{tpu_custom_call.1} parent=0
    #allocation2 [shape = 'u8[8192]{0}', space=vmem, size = 0x2000, scoped, tag = 'input window, operand 3, single buffered']
    #allocation3 [shape = 's32[1]{0}', space=sflag, size = 0x4, scoped, tag = 'scoped memory for tpu_custom_call.1']
    #allocation4 [shape = 's32[1]{0}', space=sflag, size = 0x4, scoped, tag = 'scoped memory for tpu_custom_call.1']
    #allocation5 [shape = 'u8[16384]{0}', space=vmem, size = 0x4000, scoped, tag = 'output window, operand 0, single buffered']
    #allocation6 [shape = 'u8[1024]{0}', space=vmem, size = 0x400, scoped, tag = 'output window, operand 1, single buffered']
    #allocation7 [shape = 's32[1]{0}', space=sflag, size = 0x4, scoped, tag = 'scoped memory for tpu_custom_call.1']
    %12 = vsyncpa [#allocation3], 0
    %13 = vsyncpa [#allocation4], 0
    %14 = vsyncpa [#allocation7], 0
    // Predicated region
    $region2: #{tpu_custom_call.1} parent=1 // pred_check
      _
    $region3: #{tpu_custom_call.1} parent=1 // pred_check_branch
      %16 = sbr.rel (0) target = $region5
    $region4: #{tpu_custom_call.1} parent=1 // pred_region
      _
    $region5: #{tpu_custom_call.1} parent=1 // pred_fallthru
      _
    // Predicated region
    $region6: #{tpu_custom_call.1} parent=1 // pred_check
      _
    $region7: #{tpu_custom_call.1} parent=1 // pred_check_branch
      %18 = sbr.rel (0) target = $region9
    $region8: #{tpu_custom_call.1} parent=1 // pred_region
      _
    $region9: #{tpu_custom_call.1} parent=1 // pred_fallthru
      _
    // Predicated region
    $region10: #{tpu_custom_call.1} parent=1 // pred_check
      _
    $region11: #{tpu_custom_call.1} parent=1 // pred_check_branch
      %20 = sbr.rel (0) target = $region13
    $region12: #{tpu_custom_call.1} parent=1 // pred_region
      _
    $region13: #{tpu_custom_call.1} parent=1 // pred_fallthru
      _
    // Predicated region
    $region14: #{tpu_custom_call.1} parent=1 // pred_check
      _
    $region15: #{tpu_custom_call.1} parent=1 // pred_check_branch
      %22 = sbr.rel (0) target = $region17
    $region16: #{tpu_custom_call.1} parent=1 // pred_region
      %s24 = ssub.s32 256, 256
      %25 = vsyncadd [#allocation3], %s24
      %s26 = sshll.u32 [#allocation2], 4
      %s27 = int_to_ptr.vmem [resolvable:$true] %s26
      %32 = dma.hbm_to_vmem [thread:$0]  %s3, 256, %s27, [#allocation3], 128, 128, 8
    $region17: #{tpu_custom_call.1} parent=1 // pred_fallthru
      _
    // Predicated region
    $region18: #{tpu_custom_call.1} parent=1 // pred_check
      _
    $region19: #{tpu_custom_call.1} parent=1 // pred_check_branch
      %34 = sbr.rel (0) target = $region21
    $region20: #{tpu_custom_call.1} parent=1 // pred_region
      _
    $region21: #{tpu_custom_call.1} parent=1 // pred_fallthru
      _
    // Predicated region
    $region22: #{tpu_custom_call.1} parent=1 // pred_check
      _
    $region23: #{tpu_custom_call.1} parent=1 // pred_check_branch
      %36 = sbr.rel (0) target = $region25
    $region24: #{tpu_custom_call.1} parent=1 // pred_region
      %37 = dma.done [#allocation3], 256
    $region25: #{tpu_custom_call.1} parent=1 // pred_fallthru
      _
    %v39 = vld [vmem:[%s0] sm:$0xff]
    %v40 = vld [vmem:[%s0 + $0x8] sm:$0xff]
    %v41 = vpack.c.bf16 %v40, %v39
    %v42 = vld [vmem:[%s1] sm:$0xff]
    %v43 = vld [vmem:[%s1 + $0x8] sm:$0xff]
    %v44 = vld [vmem:[%s1 + $0x10] sm:$0xff]
    %v45 = vld [vmem:[%s1 + $0x18] sm:$0xff]
    %v46 = vpack.c.bf16 %v43, %v42
    %v47 = vpack.c.bf16 %v45, %v44
    %v48 = vld [vmem:[%s2] sm:$0xff]
    %v49 = vld [vmem:[%s2 + $0x8] sm:$0xff]
    %v50 = vld [vmem:[%s2 + $0x10] sm:$0xff]
    %v51 = vld [vmem:[%s2 + $0x18] sm:$0xff]
    %v52 = vpack.c.bf16 %v49, %v48
    %v53 = vpack.c.bf16 %v51, %v50
    %vm54 = vcmask 261120
    %v56 = vsel %vm54, %v41, 0
    %58 = vmatprep.subr.bf16.mxu0 0
    %59 = vmatpush1.bf16.msra.mxu0 %v46
    %60 = vmatprep.subr.bf16.mxu0 0
    %61 = vmatpush1.bf16.msra.mxu0 %v47
    %62 = vmatprep.subr.bf16.mxu0 0
    %63 = vmatpush1.bf16.msra.mxu0 0
    %64 = vmatprep.subr.bf16.mxu0 0
    %65 = vmatpush1.bf16.msra.mxu0 0
    %66 = vmatprep.subr.bf16.mxu0 0
    %67 = vmatpush1.bf16.msra.mxu0 0
    %68 = vmatprep.subr.bf16.mxu0 0
    %69 = vmatpush1.bf16.msra.mxu0 0
    %70 = vmatprep.subr.bf16.mxu0 0
    %71 = vmatpush1.bf16.msra.mxu0 0
    %72 = vmatprep.subr.bf16.mxu0 0
    %73 = vmatpush1.bf16.msra.mxu0 0
    %74 = vmatprep.subr.bf16.mxu0 0
    %75 = vmatpush1.bf16.msra.mxu0 0
    %76 = vmatprep.subr.bf16.mxu0 0
    %77 = vmatpush1.bf16.msra.mxu0 0
    %78 = vmatprep.subr.bf16.mxu0 0
    %79 = vmatpush1.bf16.msra.mxu0 0
    %80 = vmatprep.subr.bf16.mxu0 0
    %81 = vmatpush1.bf16.msra.mxu0 0
    %82 = vmatprep.subr.bf16.mxu0 0
    %83 = vmatpush1.bf16.msra.mxu0 0
    %84 = vmatprep.subr.bf16.mxu0 0
    %85 = vmatpush1.bf16.msra.mxu0 0
    %86 = vmatprep.subr.bf16.mxu0 0
    %87 = vmatpush1.bf16.msra.mxu0 0
    %88 = vmatprep.subr.bf16.mxu0 0
    %89 = vmatpush1.bf16.msra.mxu0 0
    %90 = vmatprep.mubr.bf16.mxu0 0
    %91 = vmatmul.mubr.bf16.gmra.mrb[0].mxu0 %v56
    %v92 = vpop.f32.mrb[0].mxu0
    %v93 = vadd.f32 0.0, %v92
    %v94 = vpop.f32.mrb[0].mxu0
    %v95 = vpop.f32.mrb[0].mxu0
    %v96 = vadd.f32 0.0, %v95
    %v97 = vpop.f32.mrb[0].mxu0
    %98 = vdwg.mxu0
    %v99 = vtanh.pop %v93
    %v100 = vtanh.pop %v96
    %v101 = vpack.c.bf16 %v100, %v99
    %v103 = vsel %vm54, %v101, 0
    %105 = vmatprep.subr.bf16.mxu0 0
    %106 = vmatpush1.bf16.msra.mxu0 %v52
    %107 = vmatprep.subr.bf16.mxu0 0
    %108 = vmatpush1.bf16.msra.mxu0 %v53
    %109 = vmatprep.subr.bf16.mxu0 0
    %110 = vmatpush1.bf16.msra.mxu0 0
    %111 = vmatprep.subr.bf16.mxu0 0
    %112 = vmatpush1.bf16.msra.mxu0 0
    %113 = vmatprep.subr.bf16.mxu0 0
    %114 = vmatpush1.bf16.msra.mxu0 0
    %115 = vmatprep.subr.bf16.mxu0 0
    %116 = vmatpush1.bf16.msra.mxu0 0
    %117 = vmatprep.subr.bf16.mxu0 0
    %118 = vmatpush1.bf16.msra.mxu0 0
    %119 = vmatprep.subr.bf16.mxu0 0
    %120 = vmatpush1.bf16.msra.mxu0 0
    %121 = vmatprep.subr.bf16.mxu0 0
    %122 = vmatpush1.bf16.msra.mxu0 0
    %123 = vmatprep.subr.bf16.mxu0 0
    %124 = vmatpush1.bf16.msra.mxu0 0
    %125 = vmatprep.subr.bf16.mxu0 0
    %126 = vmatpush1.bf16.msra.mxu0 0
    %127 = vmatprep.subr.bf16.mxu0 0
    %128 = vmatpush1.bf16.msra.mxu0 0
    %129 = vmatprep.subr.bf16.mxu0 0
    %130 = vmatpush1.bf16.msra.mxu0 0
    %131 = vmatprep.subr.bf16.mxu0 0
    %132 = vmatpush1.bf16.msra.mxu0 0
    %133 = vmatprep.subr.bf16.mxu0 0
    %134 = vmatpush1.bf16.msra.mxu0 0
    %135 = vmatprep.subr.bf16.mxu0 0
    %136 = vmatpush1.bf16.msra.mxu0 0
    %137 = vmatprep.mubr.bf16.mxu0 0
    %138 = vmatmul.mubr.bf16.gmra.mrb[0].mxu0 %v103
    %v139 = vpop.f32.mrb[0].mxu0
    %v140 = vadd.f32 0.0, %v139
    %v141 = vpop.f32.mrb[0].mxu0
    %v142 = vpop.f32.mrb[0].mxu0
    %v143 = vadd.f32 0.0, %v142
    %v144 = vpop.f32.mrb[0].mxu0
    %145 = vdwg.mxu0
    %vm146 = vcmask 130048
    %v147 = vsel %vm146, %v140, -inf
    %v148 = vrot.slane %v147, 4
    %v149 = vmax.f32 %v147, %v148
    %v150 = vrot.slane %v149, 2
    %v151 = vmax.f32 %v149, %v150
    %v152 = vrot.slane %v151, 1
    %v153 = vmax.f32 %v151, %v152
    %v154 = vsub.f32 %v140, %v153
    %v155 = vmul.f32 %v154, 1.442695
    %v156 = vpow.pop %v155
    %v157 = vsel %vm146, %v156, 0.0
    %v158 = vrot.slane %v157, 4
    %v159 = vadd.f32 %v157, %v158
    %v160 = vrot.slane %v159, 2
    %v161 = vadd.f32 %v159, %v160
    %v162 = vrot.slane %v161, 1
    %v163 = vadd.f32 %v161, %v162
    %v164 = vrcp.pop %v163
    %v165 = vmul.f32 %v156, %v164
    %v166 = vpack.c.bf16 %v165, %v165
    %167 = vxpose.xlu0.c.b16.start [1/8] %v166, 128
    %168 = vxpose.xlu0.c.b16.cont [2/8] 0, 128
    %169 = vxpose.xlu0.c.b16.cont [3/8] 0, 128
    %170 = vxpose.xlu0.c.b16.cont [4/8] 0, 128
    %171 = vxpose.xlu0.c.b16.cont [5/8] 0, 128
    %172 = vxpose.xlu0.c.b16.cont [6/8] 0, 128
    %173 = vxpose.xlu0.c.b16.cont [7/8] 0, 128
    %174 = vxpose.xlu0.c.b16.end [8/8] 0, 128
    %v175 = vpop.trf.xlu0
    %v176 = vpop.trf.xlu0
    %v177 = vpop.trf.xlu0
    %v178 = vpop.trf.xlu0
    %v179 = vpop.trf.xlu0
    %v180 = vpop.trf.xlu0
    %v181 = vpop.trf.xlu0
    %v182 = vpop.trf.xlu0
    %vm183 = vcmask 64512
    %v185 = vsel %vm183, %v175, 0
    %vm187 = vcmask 1043456
    %v188 = vsel %vm187, %v41, 0
    %190 = vmatprep.subr.bf16.mxu0 0
    %191 = vmatpush1.bf16.msra.mxu0 %v188
    %192 = vmatprep.subr.bf16.mxu0 0
    %193 = vmatpush1.bf16.msra.mxu0 0
    %194 = vmatprep.subr.bf16.mxu0 0
    %195 = vmatpush1.bf16.msra.mxu0 0
    %196 = vmatprep.subr.bf16.mxu0 0
    %197 = vmatpush1.bf16.msra.mxu0 0
    %198 = vmatprep.subr.bf16.mxu0 0
    %199 = vmatpush1.bf16.msra.mxu0 0
    %200 = vmatprep.subr.bf16.mxu0 0
    %201 = vmatpush1.bf16.msra.mxu0 0
    %202 = vmatprep.subr.bf16.mxu0 0
    %203 = vmatpush1.bf16.msra.mxu0 0
    %204 = vmatprep.subr.bf16.mxu0 0
    %205 = vmatpush1.bf16.msra.mxu0 0
    %206 = vmatprep.subr.bf16.mxu0 0
    %207 = vmatpush1.bf16.msra.mxu0 0
    %208 = vmatprep.subr.bf16.mxu0 0
    %209 = vmatpush1.bf16.msra.mxu0 0
    %210 = vmatprep.subr.bf16.mxu0 0
    %211 = vmatpush1.bf16.msra.mxu0 0
    %212 = vmatprep.subr.bf16.mxu0 0
    %213 = vmatpush1.bf16.msra.mxu0 0
    %214 = vmatprep.subr.bf16.mxu0 0
    %215 = vmatpush1.bf16.msra.mxu0 0
    %216 = vmatprep.subr.bf16.mxu0 0
    %217 = vmatpush1.bf16.msra.mxu0 0
    %218 = vmatprep.subr.bf16.mxu0 0
    %219 = vmatpush1.bf16.msra.mxu0 0
    %220 = vmatprep.subr.bf16.mxu0 0
    %221 = vmatpush1.bf16.msra.mxu0 0
    %222 = vmatprep.mubr.bf16.mxu0 0
    %223 = vmatmul.mubr.bf16.gmra.mrb[0].mxu0 %v185
    %v224 = vpop.f32.mrb[0].mxu0
    %v225 = vadd.f32 0.0, %v224
    %v226 = vpop.f32.mrb[0].mxu0
    %v227 = vpop.f32.mrb[0].mxu0
    %v228 = vadd.f32 0.0, %v227
    %v229 = vpop.f32.mrb[0].mxu0
    %230 = vdwg.mxu0
    %v231 = vsel %vm146, %v143, -inf
    %v232 = vrot.slane %v231, 4
    %v233 = vmax.f32 %v231, %v232
    %v234 = vrot.slane %v233, 2
    %v235 = vmax.f32 %v233, %v234
    %v236 = vrot.slane %v235, 1
    %v237 = vmax.f32 %v235, %v236
    %v238 = vsub.f32 %v143, %v237
    %v239 = vmul.f32 %v238, 1.442695
    %v240 = vpow.pop %v239
    %v241 = vsel %vm146, %v240, 0.0
    %v242 = vrot.slane %v241, 4
    %v243 = vadd.f32 %v241, %v242
    %v244 = vrot.slane %v243, 2
    %v245 = vadd.f32 %v243, %v244
    %v246 = vrot.slane %v245, 1
    %v247 = vadd.f32 %v245, %v246
    %v248 = vrcp.pop %v247
    %v249 = vmul.f32 %v240, %v248
    %v250 = vpack.c.bf16 %v249, %v249
    %251 = vxpose.xlu0.c.b16.start [1/8] %v250, 128
    %252 = vxpose.xlu0.c.b16.cont [2/8] 0, 128
    %253 = vxpose.xlu0.c.b16.cont [3/8] 0, 128
    %254 = vxpose.xlu0.c.b16.cont [4/8] 0, 128
    %255 = vxpose.xlu0.c.b16.cont [5/8] 0, 128
    %256 = vxpose.xlu0.c.b16.cont [6/8] 0, 128
    %257 = vxpose.xlu0.c.b16.cont [7/8] 0, 128
    %258 = vxpose.xlu0.c.b16.end [8/8] 0, 128
    %v259 = vpop.trf.xlu0
    %v260 = vpop.trf.xlu0
    %v261 = vpop.trf.xlu0
    %v262 = vpop.trf.xlu0
    %v263 = vpop.trf.xlu0
    %v264 = vpop.trf.xlu0
    %v265 = vpop.trf.xlu0
    %v266 = vpop.trf.xlu0
    %v268 = vrot.slane %v41, 4
    %v270 = vsel %vm183, %v259, 0
    %v273 = vsel %vm187, %v268, 0
    %275 = vmatprep.subr.bf16.mxu0 0
    %276 = vmatpush1.bf16.msra.mxu0 %v273
    %277 = vmatprep.subr.bf16.mxu0 0
    %278 = vmatpush1.bf16.msra.mxu0 0
    %279 = vmatprep.subr.bf16.mxu0 0
    %280 = vmatpush1.bf16.msra.mxu0 0
    %281 = vmatprep.subr.bf16.mxu0 0
    %282 = vmatpush1.bf16.msra.mxu0 0
    %283 = vmatprep.subr.bf16.mxu0 0
    %284 = vmatpush1.bf16.msra.mxu0 0
    %285 = vmatprep.subr.bf16.mxu0 0
    %286 = vmatpush1.bf16.msra.mxu0 0
    %287 = vmatprep.subr.bf16.mxu0 0
    %288 = vmatpush1.bf16.msra.mxu0 0
    %289 = vmatprep.subr.bf16.mxu0 0
    %290 = vmatpush1.bf16.msra.mxu0 0
    %291 = vmatprep.subr.bf16.mxu0 0
    %292 = vmatpush1.bf16.msra.mxu0 0
    %293 = vmatprep.subr.bf16.mxu0 0
    %294 = vmatpush1.bf16.msra.mxu0 0
    %295 = vmatprep.subr.bf16.mxu0 0
    %296 = vmatpush1.bf16.msra.mxu0 0
    %297 = vmatprep.subr.bf16.mxu0 0
    %298 = vmatpush1.bf16.msra.mxu0 0
    %299 = vmatprep.subr.bf16.mxu0 0
    %300 = vmatpush1.bf16.msra.mxu0 0
    %301 = vmatprep.subr.bf16.mxu0 0
    %302 = vmatpush1.bf16.msra.mxu0 0
    %303 = vmatprep.subr.bf16.mxu0 0
    %304 = vmatpush1.bf16.msra.mxu0 0
    %305 = vmatprep.subr.bf16.mxu0 0
    %306 = vmatpush1.bf16.msra.mxu0 0
    %307 = vmatprep.mubr.bf16.mxu0 0
    %308 = vmatmul.mubr.bf16.gmra.mrb[0].mxu0 %v270
    %v309 = vpop.f32.mrb[0].mxu0
    %v310 = vadd.f32 0.0, %v309
    %v311 = vpop.f32.mrb[0].mxu0
    %v312 = vpop.f32.mrb[0].mxu0
    %v313 = vadd.f32 0.0, %v312
    %v314 = vpop.f32.mrb[0].mxu0
    %315 = vdwg.mxu0
    %316 = vst.msk [vmem:[#allocation5] sm:$0xff] %vm54, %v225
    %317 = vst.msk [vmem:[#allocation5 + $0x8] sm:$0xff] %vm54, %v228
    %318 = vst.msk [vmem:[#allocation5 + $0x10] sm:$0xff] %vm54, %v310
    %319 = vst.msk [vmem:[#allocation5 + $0x18] sm:$0xff] %vm54, %v313
    %v320 = vld [vmem:[#allocation2] sm:$0xff]
    %v321 = vld [vmem:[#allocation2 + $0x8] sm:$0xff]
    %v322 = vmul.f32 %v320, %v225
    %v323 = vmul.f32 %v321, %v228
    %v324 = vmul.f32 %v320, %v310
    %v325 = vmul.f32 %v321, %v313
    %v326 = vsel %vm54, %v322, 0.0
    %327 = vadd.xlane.f32.xlu0 %v326
    %v328 = vpop.xlane.xlu0 %327
    %v329 = vsel %vm54, %v323, 0.0
    %330 = vadd.xlane.f32.xlu0 %v329
    %v331 = vpop.xlane.xlu0 %330
    %v332 = vsel %vm54, %v324, 0.0
    %333 = vadd.xlane.f32.xlu0 %v332
    %v334 = vpop.xlane.xlu0 %333
    %v335 = vsel %vm54, %v325, 0.0
    %336 = vadd.xlane.f32.xlu0 %v335
    %v337 = vpop.xlane.xlu0 %336
    %v338 = vld [vmem:[%s4] sm:$0x1]
    %v340 = vlaneseq
    %v341 = vshrl.u32 %v340, 7
    %v342 = vsub.s32 0, %v341
    %v343 = vrot.slane %v338, %v342
    %345 = vbcast.lane.b32.xlu0 %v343, 256
    %v346 = vpop.permute.xlu0 %345
    %s348 = sor.u32 256, 8
    %349 = vbcast.lane.b32.xlu0 %v343, %s348
    %v350 = vpop.permute.xlu0 %349
    %v353 = vadd.f32 %v328, %v346
    %v354 = vadd.f32 %v331, %v350
    %v355 = vadd.f32 %v334, %v346
    %v356 = vadd.f32 %v337, %v350
    %361 = vset.pattern.permute.xlu0 0
    %362 = vperm.xlu0 %361, %v353
    %v363 = vpop.permute.xlu0 %362
    %364 = vset.pattern.permute.xlu0 0
    %365 = vperm.xlu0 %364, %v354
    %v366 = vpop.permute.xlu0 %365
    %367 = vset.pattern.permute.xlu0 0
    %368 = vperm.xlu0 %367, %v355
    %v369 = vpop.permute.xlu0 %368
    %370 = vset.pattern.permute.xlu0 0
    %371 = vperm.xlu0 %370, %v356
    %v372 = vpop.permute.xlu0 %371
    %v373 = vlaneseq
    %v374 = vand.u32 %v373, 127
    %v375 = vlaneseq
    %v376 = vshrl.u32 %v375, 7
    %v377 = vsub.s32 %v374, %v376
    %v378 = vrot.slane %v363, %v377
    %v379 = vadd.s32 %v374, 4294967288
    %v380 = vlaneseq
    %v381 = vshrl.u32 %v380, 7
    %v382 = vsub.s32 %v379, %v381
    %v383 = vrot.slane %v366, %v382
    %vm384 = vcmask 130112
    %v385 = vsel %vm384, %v383, %v378
    %v386 = vlaneseq
    %v387 = vshrl.u32 %v386, 7
    %v388 = vsub.s32 %v374, %v387
    %v389 = vrot.slane %v369, %v388
    %v390 = vlaneseq
    %v391 = vshrl.u32 %v390, 7
    %v392 = vsub.s32 %v379, %v391
    %v393 = vrot.slane %v372, %v392
    %v394 = vsel %vm384, %v393, %v389
    %vm395 = vcmask 1041409
    %v396 = vsel %vm395, %v394, %v385
    %vm398 = vcmask 123904
    %399 = vst.msk [vmem:[#allocation6] sm:$0x3] %vm398, %v396
    // Predicated region
    $region26: #{tpu_custom_call.1} parent=1 // pred_check
      _
    $region27: #{tpu_custom_call.1} parent=1 // pred_check_branch
      %401 = sbr.rel (0) target = $region29
    $region28: #{tpu_custom_call.1} parent=1 // pred_region
      %s403 = ssub.s32 512, 512
      %404 = vsyncadd [#allocation4], %s403
      %s405 = sshll.u32 [#allocation5], 4
      %s406 = int_to_ptr.vmem [resolvable:$true] %s405
      %411 = dma.vmem_to_hbm [thread:$0]  %s406, 512, %s5, [#allocation4], 128, 128, 8
    $region29: #{tpu_custom_call.1} parent=1 // pred_fallthru
      _
    // Predicated region
    $region30: #{tpu_custom_call.1} parent=1 // pred_check
      _
    $region31: #{tpu_custom_call.1} parent=1 // pred_check_branch
      %413 = sbr.rel (0) target = $region33
    $region32: #{tpu_custom_call.1} parent=1 // pred_region
      %s415 = ssub.s32 32, 32
      %416 = vsyncadd [#allocation7], %s415
      %s418 = sshll.u32 [#allocation6], 4
      %s419 = int_to_ptr.vmem [resolvable:$true] %s418
      %421 = dma.vmem_to_hbm [thread:$0]  %s419, 32, %s6, [#allocation7]
    $region33: #{tpu_custom_call.1} parent=1 // pred_fallthru
      _
    // Predicated region
    $region34: #{tpu_custom_call.1} parent=1 // pred_check
      _
    $region35: #{tpu_custom_call.1} parent=1 // pred_check_branch
      %423 = sbr.rel (0) target = $region37
    $region36: #{tpu_custom_call.1} parent=1 // pred_region
      %424 = dma.done [#allocation4], 512
    $region37: #{tpu_custom_call.1} parent=1 // pred_fallthru
      _
    // Predicated region
    $region38: #{tpu_custom_call.1} parent=1 // pred_check
      _
    $region39: #{tpu_custom_call.1} parent=1 // pred_check_branch
      %426 = sbr.rel (0) target = $region41
    $region40: #{tpu_custom_call.1} parent=1 // pred_region
      %427 = dma.done [#allocation7], 32
    $region41: #{tpu_custom_call.1} parent=1 // pred_fallthru
      _
    %428 = vsyncpa [#allocation3], 1
    %429 = vsyncpa [#allocation4], 1
    %430 = vsyncpa [#allocation7], 1

</llo_original>
